<compile_context>
chip_gen: v5e
topology: v5e:2x2
jax: 0.10.0
libtpu: 0.0.40
codegen_flags: <defaults>
</compile_context>

<pallas_src>
import math

import jax
import jax.numpy as jnp
from jax.experimental import pallas as pl
from jax.experimental.pallas import tpu as pltpu

_RNG = 5.0
_SZ = 256.0

_LANE = 1024         # lane (last-dim) width per block: multiple of 128, lane-dense
_MAX_SUBLANE = 512   # sublane rows per block: 512*1024*4B = 2 MiB (f32) per buffer


def _round_up(x: int, m: int) -> int:
    return (x + m - 1) // m * m


def _depth_normalizer_kernel(z_ref, o_ref):
    # Elementwise hot path on the VPU.  Compute in f32 with the same op order
    # as the reference (x * 256.0) / 5.0, then cast back to the output dtype.
    x = z_ref[...].astype(jnp.float32)
    o_ref[...] = ((x * _SZ) / _RNG).astype(o_ref.dtype)


def depth_normalizer(z: jax.Array) -> jax.Array:
    """z: [B, 1, N] -> z_feat: [B, 1, N] = z * 256 / 5."""
    orig_shape = z.shape
    dtype = jnp.dtype(z.dtype)
    total = math.prod(orig_shape)

    # Sublane packing multiple for the dtype (f32: 8, bf16/f16: 16, int8: 32).
    itemsize = dtype.itemsize
    pack = 8 * (4 // itemsize) if itemsize in (1, 2, 4) else 8

    # Lane-dense 2-D slab: (rows, _LANE), rows padded so tiles divide evenly.
    rows = max(1, -(-total // _LANE))
    rows = _round_up(rows, pack)
    tile_rows = min(_MAX_SUBLANE, rows)
    rows = _round_up(rows, tile_rows)
    padded = rows * _LANE

    flat = z.reshape(-1)
    if padded != total:
        flat = jnp.pad(flat, (0, padded - total))
    slab = flat.reshape(rows, _LANE)

    out = pl.pallas_call(
        _depth_normalizer_kernel,
        out_shape=jax.ShapeDtypeStruct((rows, _LANE), dtype),
        grid=(rows // tile_rows,),
        in_specs=[pl.BlockSpec((tile_rows, _LANE), lambda i: (i, 0))],
        out_specs=pl.BlockSpec((tile_rows, _LANE), lambda i: (i, 0)),
        compiler_params=pltpu.CompilerParams(
            dimension_semantics=("parallel",),       # shards across v7x's 2 TCs
            vmem_limit_bytes=32 * 1024 * 1024,       # explicit headroom on all gens
        ),
    )(slab)

    return out.reshape(-1)[:total].reshape(orig_shape)


if __name__ == "__main__":
    key = jax.random.PRNGKey(0)
    B, C, N = 2, 1, 8  # [B, 1, N] depth feature
    z = jax.random.normal(key, (B, C, N), dtype=jnp.float32)

    out = depth_normalizer(z)
    jax.block_until_ready(out)

    ref = z * 256.0 / 5.0
    assert out.shape == z.shape and out.dtype == z.dtype
    assert jnp.allclose(out, ref, rtol=1e-6, atol=1e-6)

    print("KERNEL_OK")
</pallas_src>

<mosaic_0001>
module attributes {stable_mosaic.version = 11 : i64} {
  func.func @_depth_normalizer_kernel(%arg0: i32, %arg1: memref<8x1024xf32, #tpu.memory_space<vmem>>, %arg2: memref<8x1024xf32, #tpu.memory_space<vmem>>) attributes {dimension_semantics = [#tpu.dimension_semantics<parallel>], iteration_bounds = array<i64: 1>, scalar_prefetch = 0 : i64, scratch_operands = 0 : i64, tpu.core_type = #tpu.core_type<tc>, window_params = [{transform_indices = @transform_0, window_bounds = array<i64: 8, 1024>}, {transform_indices = @transform_1, window_bounds = array<i64: 8, 1024>}]} {
    %c0 = arith.constant 0 : index
    %c0_0 = arith.constant 0 : index
    %0 = vector.load %arg1[%c0, %c0_0] : memref<8x1024xf32, #tpu.memory_space<vmem>>, vector<8x1024xf32>
    %cst = arith.constant 2.560000e+02 : f32
    %1 = vector.broadcast %cst : f32 to vector<8x1024xf32>
    %2 = arith.mulf %0, %1 : vector<8x1024xf32>
    %cst_1 = arith.constant 5.000000e+00 : f32
    %3 = vector.broadcast %cst_1 : f32 to vector<8x1024xf32>
    %4 = arith.divf %2, %3 : vector<8x1024xf32>
    %c0_2 = arith.constant 0 : index
    %c0_3 = arith.constant 0 : index
    %5 = vector.load %arg2[%c0_2, %c0_3] : memref<8x1024xf32, #tpu.memory_space<vmem>>, vector<8x1024xf32>
    tpu.vector_store %arg2[%c0_2, %c0_3], %4 {strides = array<i32>} : memref<8x1024xf32, #tpu.memory_space<vmem>>, vector<8x1024xf32>,
    return
  }
  func.func @transform_0(%arg0: i32) -> (i32, i32) {
    %c0_i32 = arith.constant 0 : i32
    %c0_i32_0 = arith.constant 0 : i32
    return %arg0, %c0_i32 : i32, i32
  }
  func.func @transform_1(%arg0: i32) -> (i32, i32) {
    %c0_i32 = arith.constant 0 : i32
    %c0_i32_0 = arith.constant 0 : i32
    return %arg0, %c0_i32 : i32, i32
  }
}

</mosaic_0001>

<llo_original>
// kernel: tpu_custom_call.1
$region0: #{tpu_custom_call.1}
  #allocation0 [shape = 'u32[]', space=smem, size = 0x4, offset = 0x4, fixed_abs, tag = 'smem constant byte address 0x4 - core index']
  #allocation1 [shape = 'u32[72,128]{1,0:T(1,128)}', space=vmem, size = 0x9000, scoped, tag = 'internal scratch']
  %s0 = inlined_call_operand.hbm [shape: f32[8,1024], index: 0, kind: input, shape index: {}]
  %s1 = inlined_call_operand.hbm [shape: f32[8,1024], index: 1, kind: output, shape index: {}]
  %s2 = sld [smem:[#allocation0]]
  $region18: #{tpu_custom_call.1} parent=0
    _
  %s4 = ssub.s32 1, %s2
  %s5 = scalar_select 0, %s4, %s2
  $region1: #{tpu_custom_call.1} parent=0
    #allocation2 [shape = 'u8[32768]{0}', space=vmem, size = 0x8000, scoped, tag = 'input window, operand 0, single buffered']
    #allocation3 [shape = 's32[1]{0}', space=sflag, size = 0x4, scoped, tag = 'scoped memory for tpu_custom_call.1']
    #allocation4 [shape = 's32[1]{0}', space=sflag, size = 0x4, scoped, tag = 'scoped memory for tpu_custom_call.1']
    #allocation5 [shape = 'u8[32768]{0}', space=vmem, size = 0x8000, scoped, tag = 'output window, operand 0, single buffered']
    %6 = vsyncpa [#allocation3], 0
    %7 = vsyncpa [#allocation4], 0
    // Predicated region
    $region2: #{tpu_custom_call.1} parent=1 // pred_check
      _
    $region3: #{tpu_custom_call.1} parent=1 // pred_check_branch
      %9 = sbr.rel (0) target = $region5
    $region4: #{tpu_custom_call.1} parent=1 // pred_region
      %11 = vsyncadd [#allocation3], 0
      %s13 = sshll.u32 %s0, 4
      %s14 = int_to_ptr.hbm [resolvable:$true] %s13
      %s15 = sshll.u32 [#allocation2], 4
      %s16 = int_to_ptr.vmem [resolvable:$true] %s15
      %18 = dma.hbm_to_vmem [thread:$0]  %s14, 1024, %s16, [#allocation3]
    $region5: #{tpu_custom_call.1} parent=1 // pred_fallthru
      _
    // Predicated region
    $region6: #{tpu_custom_call.1} parent=1 // pred_check
      _
    $region7: #{tpu_custom_call.1} parent=1 // pred_check_branch
      %20 = sbr.rel (0) target = $region9
    $region8: #{tpu_custom_call.1} parent=1 // pred_region
      %22 = dma.done [#allocation3], 1024
    $region9: #{tpu_custom_call.1} parent=1 // pred_fallthru
      _
    %v23 = vld [vmem:[#allocation2] sm:$0xff]
    %v24 = vld [vmem:[#allocation2 + $0x8] sm:$0xff]
    %v25 = vld [vmem:[#allocation2 + $0x10] sm:$0xff]
    %v26 = vld [vmem:[#allocation2 + $0x18] sm:$0xff]
    %v27 = vld [vmem:[#allocation2 + $0x20] sm:$0xff]
    %v28 = vld [vmem:[#allocation2 + $0x28] sm:$0xff]
    %v29 = vld [vmem:[#allocation2 + $0x30] sm:$0xff]
    %v30 = vld [vmem:[#allocation2 + $0x38] sm:$0xff]
    %v31 = vmul.f32 %v23, 256.0
    %v32 = vmul.f32 %v24, 256.0
    %v33 = vmul.f32 %v25, 256.0
    %v34 = vmul.f32 %v26, 256.0
    %v35 = vmul.f32 %v27, 256.0
    %v36 = vmul.f32 %v28, 256.0
    %v37 = vmul.f32 %v29, 256.0
    %v38 = vmul.f32 %v30, 256.0
    %v39 = vrcp.pop 5.0
    %v40 = vmul.f32 5.0, %v39
    %v41 = vsub.f32 1.0, %v40
    %v42 = vmul.f32 %v39, %v41
    %v43 = vadd.f32 %v39, %v42
    %vm44 = vweird.f32 %v39
    %v45 = vsel %vm44, %v39, %v43
    %v46 = vmul.f32 %v31, %v45
    %v47 = vmul.f32 %v32, %v45
    %v48 = vmul.f32 %v33, %v45
    %v49 = vmul.f32 %v34, %v45
    %v50 = vmul.f32 %v35, %v45
    %v51 = vmul.f32 %v36, %v45
    %v52 = vmul.f32 %v37, %v45
    %v53 = vmul.f32 %v38, %v45
    %54 = vst [vmem:[#allocation5] sm:$0xff] %v46
    %55 = vst [vmem:[#allocation5 + $0x8] sm:$0xff] %v47
    %56 = vst [vmem:[#allocation5 + $0x10] sm:$0xff] %v48
    %57 = vst [vmem:[#allocation5 + $0x18] sm:$0xff] %v49
    %58 = vst [vmem:[#allocation5 + $0x20] sm:$0xff] %v50
    %59 = vst [vmem:[#allocation5 + $0x28] sm:$0xff] %v51
    %60 = vst [vmem:[#allocation5 + $0x30] sm:$0xff] %v52
    %61 = vst [vmem:[#allocation5 + $0x38] sm:$0xff] %v53
    // Predicated region
    $region10: #{tpu_custom_call.1} parent=1 // pred_check
      _
    $region11: #{tpu_custom_call.1} parent=1 // pred_check_branch
      %63 = sbr.rel (0) target = $region13
    $region12: #{tpu_custom_call.1} parent=1 // pred_region
      %65 = vsyncadd [#allocation4], 0
      %s67 = sshll.u32 [#allocation5], 4
      %s68 = int_to_ptr.vmem [resolvable:$true] %s67
      %s69 = sshll.u32 %s1, 4
      %s70 = int_to_ptr.hbm [resolvable:$true] %s69
      %72 = dma.vmem_to_hbm [thread:$0]  %s68, 1024, %s70, [#allocation4]
    $region13: #{tpu_custom_call.1} parent=1 // pred_fallthru
      _
    // Predicated region
    $region14: #{tpu_custom_call.1} parent=1 // pred_check
      _
    $region15: #{tpu_custom_call.1} parent=1 // pred_check_branch
      %74 = sbr.rel (0) target = $region17
    $region16: #{tpu_custom_call.1} parent=1 // pred_region
      %76 = dma.done [#allocation4], 1024
    $region17: #{tpu_custom_call.1} parent=1 // pred_fallthru
      _
    %77 = vsyncpa [#allocation3], 1
    %78 = vsyncpa [#allocation4], 1

</llo_original>
